<compile_context>
chip_gen: v5e
topology: v5e:2x2
jax: 0.10.0
libtpu: 0.0.40
codegen_flags: <defaults>
</compile_context>

<pallas_src>
import jax
import jax.numpy as jnp
from jax.experimental import pallas as pl
from jax.experimental.pallas import tpu as pltpu

# ---- model dims (args.getint('Model', 'input_dim') / 'output_dim') ----
INPUT_DIM = 64      # flattened (4, 4, 4) input
HIDDEN1 = 50
HIDDEN2 = 30
OUTPUT_DIM = 10
BATCH = 8

LANE = 128          # TPU lane width: all padded feature dims
TB_MAX = 4096       # max batch-tile rows (review: 2048-4096; ~10 MB footprint max)


def _round_up(x, m):
    return (x + m - 1) // m * m


def _num_tensorcores():
    """TensorCores per device (2 on v7x, 1 on v5e/v6e). Conservative fallback=1."""
    try:
        dev = jax.devices()[0]
        n = getattr(dev, "num_cores", None)
        if isinstance(n, int) and n > 0:
            return n
        kind = (getattr(dev, "device_kind", "") or "").lower()
        return 2 if "7" in kind else 1
    except Exception:
        return 1


def _pick_tb(b, num_cores, tb_max):
    """Batch-tile rows: multiple of 16 (bf16 sublane packing), capped at tb_max,
    and split so the 'parallel' grid has >= num_cores steps on multi-TC chips."""
    tb = min(tb_max, _round_up(b, 16))
    if num_cores > 1 and b >= 64:
        per_core = _round_up(pl.cdiv(b, num_cores), 16)
        tb = min(tb, per_core)
    return max(tb, 16)


def mlp_kernel(x_ref, w1_ref, b1_ref, w2_ref, b2_ref, w3_ref, b3_ref, o_ref):
    """Fused 3-layer MLP on one (TB, K) batch tile.

    bf16 operands feed the MXU; accumulation, bias add and ReLU stay in f32;
    activations are re-cast to bf16 only at the next dot input.
    """
    x = x_ref[...]                                                    # (TB, K) bf16
    h1 = jnp.dot(x, w1_ref[...], preferred_element_type=jnp.float32) + b1_ref[...]
    h1 = jnp.maximum(h1, 0.0)                                         # f32 VPU
    h2 = jnp.dot(h1.astype(w2_ref.dtype), w2_ref[...],
                 preferred_element_type=jnp.float32) + b2_ref[...]
    h2 = jnp.maximum(h2, 0.0)
    o_ref[...] = (jnp.dot(h2.astype(w3_ref.dtype), w3_ref[...],
                          preferred_element_type=jnp.float32)
                  + b3_ref[...]).astype(o_ref.dtype)                  # lane-dense store


def _pad2d(a, rows, cols):
    return jnp.pad(a, ((0, rows - a.shape[0]), (0, cols - a.shape[1])))


def prepare_params(params):
    """One-time lane-padding (zeros -> math exactly preserved) and dtype casts.

    Hoisted out of the per-call forward so repeated inference pays for the
    six pad/convert XLA ops exactly once.
    NOTE: weights here are stored as (in, out); a real torch nn.Linear.weight
    is (out, in) and must be transposed when loading a checkpoint.
    """
    w1, b1, w2, b2, w3, b3 = params
    k = w1.shape[0]
    w1p = _pad2d(w1, k,    LANE).astype(jnp.bfloat16)
    w2p = _pad2d(w2, LANE, LANE).astype(jnp.bfloat16)
    w3p = _pad2d(w3, LANE, LANE).astype(jnp.bfloat16)
    b1p = _pad2d(b1, 1, LANE).astype(jnp.float32)
    b2p = _pad2d(b2, 1, LANE).astype(jnp.float32)
    b3p = _pad2d(b3, 1, LANE).astype(jnp.float32)
    return (w1p, b1p, w2p, b2p, w3p, b3p)


def make_mlp_forward(out_dim, num_cores=None, tb_max=TB_MAX):
    """Builds the jitted forward. `out_dim`/`num_cores`/`tb_max` are static."""
    if num_cores is None:
        num_cores = _num_tensorcores()

    @jax.jit
    def forward(x, padded_params):
        w1p, b1p, w2p, b2p, w3p, b3p = padded_params
        b = x.shape[0]
        x2d = x.reshape(b, -1)                 # like x.view(B, -1); no extra astype
        k = x2d.shape[1]

        tb = _pick_tb(b, num_cores, tb_max)
        b_pad = _round_up(b, tb)
        xbf = x2d.astype(jnp.bfloat16)         # cast first -> any row-pad moves half the bytes
        if b_pad != b:
            xbf = jnp.pad(xbf, ((0, b_pad - b), (0, 0)))

        const = lambda i: (0, 0)   # weights/biases: same block every step -> VMEM-resident

        out = pl.pallas_call(
            mlp_kernel,
            out_shape=jax.ShapeDtypeStruct((b_pad, LANE), jnp.float32),
            grid=(b_pad // tb,),
            in_specs=[
                pl.BlockSpec((tb, k), lambda i: (i, 0)),
                pl.BlockSpec((k, LANE), const),    pl.BlockSpec((1, LANE), const),
                pl.BlockSpec((LANE, LANE), const), pl.BlockSpec((1, LANE), const),
                pl.BlockSpec((LANE, LANE), const), pl.BlockSpec((1, LANE), const),
            ],
            out_specs=pl.BlockSpec((tb, LANE), lambda i: (i, 0)),
            compiler_params=pltpu.CompilerParams(
                dimension_semantics=("parallel",)),   # batch tiles shard across TCs (v7x)
        )(xbf, w1p, b1p, w2p, b2p, w3p, b3p)

        # slice padded lanes / rows back to the logical output
        return out[:b, :out_dim]

    return forward


def init_params(key):
    """Deterministic init mimicking PyTorch nn.Linear default:
    U(-1/sqrt(fan_in), 1/sqrt(fan_in)) for weight and bias.
    Stored as (in, out) / (1, out); real nn.Linear weights would need a transpose."""
    dims = [(INPUT_DIM, HIDDEN1), (HIDDEN1, HIDDEN2), (HIDDEN2, OUTPUT_DIM)]
    params = []
    for (fan_in, fan_out) in dims:
        key, kw, kb = jax.random.split(key, 3)
        bound = 1.0 / jnp.sqrt(fan_in)
        w = jax.random.uniform(kw, (fan_in, fan_out), jnp.float32, -bound, bound)
        bias = jax.random.uniform(kb, (1, fan_out), jnp.float32, -bound, bound)
        params += [w, bias]
    return tuple(params)


def reference_forward(x, params):
    """Pure-JAX reference mirroring the kernel's bf16-operand / f32-accumulate path."""
    b = x.shape[0]
    h = x.reshape(b, -1).astype(jnp.float32)
    w1, b1, w2, b2, w3, b3 = params
    bf = jnp.bfloat16
    h1 = jnp.maximum(
        jnp.dot(h.astype(bf), w1.astype(bf), preferred_element_type=jnp.float32) + b1, 0.0)
    h2 = jnp.maximum(
        jnp.dot(h1.astype(bf), w2.astype(bf), preferred_element_type=jnp.float32) + b2, 0.0)
    return jnp.dot(h2.astype(bf), w3.astype(bf), preferred_element_type=jnp.float32) + b3


if __name__ == "__main__":
    key = jax.random.PRNGKey(0)
    key, kx = jax.random.split(key)
    # image-like batch; forward flattens it to (BATCH, INPUT_DIM)
    x = jax.random.normal(kx, (BATCH, 4, 4, 4), jnp.float32)
    params = init_params(key)

    padded_params = prepare_params(params)       # one-time param prep (hoisted)
    mlp_forward = make_mlp_forward(out_dim=OUTPUT_DIM)

    out = jax.block_until_ready(mlp_forward(x, padded_params))
    ref = reference_forward(x, params)
    assert out.shape == (BATCH, OUTPUT_DIM)
    assert jnp.allclose(out, ref, atol=2e-3, rtol=2e-3)

    # larger (still small) batch exercises the multi-tile / multi-TC grid path
    key, kx2 = jax.random.split(key)
    x2 = jax.random.normal(kx2, (160, 4, 4, 4), jnp.float32)
    out2 = jax.block_until_ready(mlp_forward(x2, padded_params))
    ref2 = reference_forward(x2, params)
    assert out2.shape == (160, OUTPUT_DIM)
    assert jnp.allclose(out2, ref2, atol=2e-3, rtol=2e-3)

    print("KERNEL_OK")
</pallas_src>

<mosaic_0001>
module attributes {stable_mosaic.version = 11 : i64} {
  func.func @mlp_kernel(%arg0: i32, %arg1: memref<16x64xbf16, #tpu.memory_space<vmem>>, %arg2: memref<64x128xbf16, #tpu.memory_space<vmem>>, %arg3: memref<1x128xf32, #tpu.memory_space<vmem>>, %arg4: memref<128x128xbf16, #tpu.memory_space<vmem>>, %arg5: memref<1x128xf32, #tpu.memory_space<vmem>>, %arg6: memref<128x128xbf16, #tpu.memory_space<vmem>>, %arg7: memref<1x128xf32, #tpu.memory_space<vmem>>, %arg8: memref<16x128xf32, #tpu.memory_space<vmem>>) attributes {dimension_semantics = [#tpu.dimension_semantics<parallel>], iteration_bounds = array<i64: 1>, scalar_prefetch = 0 : i64, scratch_operands = 0 : i64, tpu.core_type = #tpu.core_type<tc>, window_params = [{transform_indices = @transform_0, window_bounds = array<i64: 16, 64>}, {pipeline_mode = #tpu.pipeline_mode<synchronous>, transform_indices = @transform_1, window_bounds = array<i64: 64, 128>}, {pipeline_mode = #tpu.pipeline_mode<synchronous>, transform_indices = @transform_2, window_bounds = array<i64: 1, 128>}, {pipeline_mode = #tpu.pipeline_mode<synchronous>, transform_indices = @transform_3, window_bounds = array<i64: 128, 128>}, {pipeline_mode = #tpu.pipeline_mode<synchronous>, transform_indices = @transform_4, window_bounds = array<i64: 1, 128>}, {pipeline_mode = #tpu.pipeline_mode<synchronous>, transform_indices = @transform_5, window_bounds = array<i64: 128, 128>}, {pipeline_mode = #tpu.pipeline_mode<synchronous>, transform_indices = @transform_6, window_bounds = array<i64: 1, 128>}, {transform_indices = @transform_7, window_bounds = array<i64: 16, 128>}]} {
    %c0 = arith.constant 0 : index
    %c0_0 = arith.constant 0 : index
    %0 = vector.load %arg1[%c0, %c0_0] : memref<16x64xbf16, #tpu.memory_space<vmem>>, vector<16x64xbf16>
    %c0_1 = arith.constant 0 : index
    %c0_2 = arith.constant 0 : index
    %1 = vector.load %arg2[%c0_1, %c0_2] : memref<64x128xbf16, #tpu.memory_space<vmem>>, vector<64x128xbf16>
    %cst = arith.constant dense<0.000000e+00> : vector<16x128xf32>
    %2 = tpu.matmul %0, %1, %cst {dimension_numbers = #tpu.dot_dimension_numbers<[1], [0], [0], [1], [0, 0, 1, 1], [], []>} : vector<16x64xbf16>, vector<64x128xbf16>, vector<16x128xf32> -> vector<16x128xf32>
    %c0_3 = arith.constant 0 : index
    %c0_4 = arith.constant 0 : index
    %3 = vector.load %arg3[%c0_3, %c0_4] : memref<1x128xf32, #tpu.memory_space<vmem>>, vector<1x128xf32>
    %4 = vector.broadcast %3 : vector<1x128xf32> to vector<16x128xf32>
    %5 = arith.addf %2, %4 : vector<16x128xf32>
    %cst_5 = arith.constant 0.000000e+00 : f32
    %6 = vector.broadcast %cst_5 : f32 to vector<16x128xf32>
    %7 = arith.maximumf %5, %6 : vector<16x128xf32>
    %8 = arith.truncf %7 : vector<16x128xf32> to vector<16x128xbf16>
    %c0_6 = arith.constant 0 : index
    %c0_7 = arith.constant 0 : index
    %9 = vector.load %arg4[%c0_6, %c0_7] : memref<128x128xbf16, #tpu.memory_space<vmem>>, vector<128x128xbf16>
    %cst_8 = arith.constant dense<0.000000e+00> : vector<16x128xf32>
    %10 = tpu.matmul %8, %9, %cst_8 {dimension_numbers = #tpu.dot_dimension_numbers<[1], [0], [0], [1], [0, 0, 1, 1], [], []>} : vector<16x128xbf16>, vector<128x128xbf16>, vector<16x128xf32> -> vector<16x128xf32>
    %c0_9 = arith.constant 0 : index
    %c0_10 = arith.constant 0 : index
    %11 = vector.load %arg5[%c0_9, %c0_10] : memref<1x128xf32, #tpu.memory_space<vmem>>, vector<1x128xf32>
    %12 = vector.broadcast %11 : vector<1x128xf32> to vector<16x128xf32>
    %13 = arith.addf %10, %12 : vector<16x128xf32>
    %cst_11 = arith.constant 0.000000e+00 : f32
    %14 = vector.broadcast %cst_11 : f32 to vector<16x128xf32>
    %15 = arith.maximumf %13, %14 : vector<16x128xf32>
    %16 = arith.truncf %15 : vector<16x128xf32> to vector<16x128xbf16>
    %c0_12 = arith.constant 0 : index
    %c0_13 = arith.constant 0 : index
    %17 = vector.load %arg6[%c0_12, %c0_13] : memref<128x128xbf16, #tpu.memory_space<vmem>>, vector<128x128xbf16>
    %cst_14 = arith.constant dense<0.000000e+00> : vector<16x128xf32>
    %18 = tpu.matmul %16, %17, %cst_14 {dimension_numbers = #tpu.dot_dimension_numbers<[1], [0], [0], [1], [0, 0, 1, 1], [], []>} : vector<16x128xbf16>, vector<128x128xbf16>, vector<16x128xf32> -> vector<16x128xf32>
    %c0_15 = arith.constant 0 : index
    %c0_16 = arith.constant 0 : index
    %19 = vector.load %arg7[%c0_15, %c0_16] : memref<1x128xf32, #tpu.memory_space<vmem>>, vector<1x128xf32>
    %20 = vector.broadcast %19 : vector<1x128xf32> to vector<16x128xf32>
    %21 = arith.addf %18, %20 : vector<16x128xf32>
    %c0_17 = arith.constant 0 : index
    %c0_18 = arith.constant 0 : index
    %22 = vector.load %arg8[%c0_17, %c0_18] : memref<16x128xf32, #tpu.memory_space<vmem>>, vector<16x128xf32>
    tpu.vector_store %arg8[%c0_17, %c0_18], %21 {strides = array<i32>} : memref<16x128xf32, #tpu.memory_space<vmem>>, vector<16x128xf32>,
    return
  }
  func.func @transform_0(%arg0: i32) -> (i32, i32) {
    %c0_i32 = arith.constant 0 : i32
    %c0_i32_0 = arith.constant 0 : i32
    return %arg0, %c0_i32 : i32, i32
  }
  func.func @transform_1(%arg0: i32) -> (i32, i32) {
    %c0_i32 = arith.constant 0 : i32
    %c0_i32_0 = arith.constant 0 : i32
    %c0_i32_1 = arith.constant 0 : i32
    return %c0_i32, %c0_i32_0 : i32, i32
  }
  func.func @transform_2(%arg0: i32) -> (i32, i32) {
    %c0_i32 = arith.constant 0 : i32
    %c0_i32_0 = arith.constant 0 : i32
    %c0_i32_1 = arith.constant 0 : i32
    return %c0_i32, %c0_i32_0 : i32, i32
  }
  func.func @transform_3(%arg0: i32) -> (i32, i32) {
    %c0_i32 = arith.constant 0 : i32
    %c0_i32_0 = arith.constant 0 : i32
    %c0_i32_1 = arith.constant 0 : i32
    return %c0_i32, %c0_i32_0 : i32, i32
  }
  func.func @transform_4(%arg0: i32) -> (i32, i32) {
    %c0_i32 = arith.constant 0 : i32
    %c0_i32_0 = arith.constant 0 : i32
    %c0_i32_1 = arith.constant 0 : i32
    return %c0_i32, %c0_i32_0 : i32, i32
  }
  func.func @transform_5(%arg0: i32) -> (i32, i32) {
    %c0_i32 = arith.constant 0 : i32
    %c0_i32_0 = arith.constant 0 : i32
    %c0_i32_1 = arith.constant 0 : i32
    return %c0_i32, %c0_i32_0 : i32, i32
  }
  func.func @transform_6(%arg0: i32) -> (i32, i32) {
    %c0_i32 = arith.constant 0 : i32
    %c0_i32_0 = arith.constant 0 : i32
    %c0_i32_1 = arith.constant 0 : i32
    return %c0_i32, %c0_i32_0 : i32, i32
  }
  func.func @transform_7(%arg0: i32) -> (i32, i32) {
    %c0_i32 = arith.constant 0 : i32
    %c0_i32_0 = arith.constant 0 : i32
    return %arg0, %c0_i32 : i32, i32
  }
}

</mosaic_0001>

<llo_original>
// kernel: forward.1
$region0: #{forward.1}
  #allocation0 [shape = 'u32[]', space=smem, size = 0x4, offset = 0x4, fixed_abs, tag = 'smem constant byte address 0x4 - core index']
  #allocation1 [shape = 'u32[72,128]{1,0:T(1,128)}', space=vmem, size = 0x9000, scoped, tag = 'internal scratch']
  %s0 = inlined_call_operand.vmem [shape: bf16[16,64], index: 0, kind: input, shape index: {}]
  %s1 = inlined_call_operand.hbm [shape: bf16[64,128], index: 1, kind: input, shape index: {}]
  %s2 = inlined_call_operand.vmem [shape: f32[1,128], index: 2, kind: input, shape index: {}]
  %s3 = inlined_call_operand.vmem [shape: bf16[128,128], index: 3, kind: input, shape index: {}]
  %s4 = inlined_call_operand.vmem [shape: f32[1,128], index: 4, kind: input, shape index: {}]
  %s5 = inlined_call_operand.vmem [shape: bf16[128,128], index: 5, kind: input, shape index: {}]
  %s6 = inlined_call_operand.vmem [shape: f32[1,128], index: 6, kind: input, shape index: {}]
  %s7 = inlined_call_operand.vmem [shape: f32[16,128], index: 7, kind: output, shape index: {}]
  %s8 = sld [smem:[#allocation0]]
  $region42: #{forward.1} parent=0
    _
  %s10 = ssub.s32 1, %s8
  %s11 = scalar_select 0, %s10, %s8
  $region1: #{forward.1} parent=0
    #allocation2 [shape = 'u8[16384]{0}', space=vmem, size = 0x4000, scoped, tag = 'input window, operand 1, single buffered']
    #allocation3 [shape = 's32[1]{0}', space=sflag, size = 0x4, scoped, tag = 'scoped memory for forward.1']
    %12 = vsyncpa [#allocation3], 0
    // Predicated region
    $region2: #{forward.1} parent=1 // pred_check
      _
    $region3: #{forward.1} parent=1 // pred_check_branch
      %14 = sbr.rel (0) target = $region5
    $region4: #{forward.1} parent=1 // pred_region
      _
    $region5: #{forward.1} parent=1 // pred_fallthru
      _
    // Predicated region
    $region6: #{forward.1} parent=1 // pred_check
      _
    $region7: #{forward.1} parent=1 // pred_check_branch
      %16 = sbr.rel (0) target = $region9
    $region8: #{forward.1} parent=1 // pred_region
      %18 = vsyncadd [#allocation3], 0
      %s19 = sshll.u32 %s1, 4
      %s20 = int_to_ptr.hbm [resolvable:$true] %s19
      %s21 = sshll.u32 [#allocation2], 4
      %s22 = int_to_ptr.vmem [resolvable:$true] %s21
      %27 = dma.hbm_to_vmem [thread:$0]  %s20, 512, %s22, [#allocation3], 64, 64, 4
    $region9: #{forward.1} parent=1 // pred_fallthru
      _
    // Predicated region
    $region10: #{forward.1} parent=1 // pred_check
      _
    $region11: #{forward.1} parent=1 // pred_check_branch
      %29 = sbr.rel (0) target = $region13
    $region12: #{forward.1} parent=1 // pred_region
      _
    $region13: #{forward.1} parent=1 // pred_fallthru
      _
    // Predicated region
    $region14: #{forward.1} parent=1 // pred_check
      _
    $region15: #{forward.1} parent=1 // pred_check_branch
      %31 = sbr.rel (0) target = $region17
    $region16: #{forward.1} parent=1 // pred_region
      _
    $region17: #{forward.1} parent=1 // pred_fallthru
      _
    // Predicated region
    $region18: #{forward.1} parent=1 // pred_check
      _
    $region19: #{forward.1} parent=1 // pred_check_branch
      %33 = sbr.rel (0) target = $region21
    $region20: #{forward.1} parent=1 // pred_region
      _
    $region21: #{forward.1} parent=1 // pred_fallthru
      _
    // Predicated region
    $region22: #{forward.1} parent=1 // pred_check
      _
    $region23: #{forward.1} parent=1 // pred_check_branch
      %35 = sbr.rel (0) target = $region25
    $region24: #{forward.1} parent=1 // pred_region
      _
    $region25: #{forward.1} parent=1 // pred_fallthru
      _
    // Predicated region
    $region26: #{forward.1} parent=1 // pred_check
      _
    $region27: #{forward.1} parent=1 // pred_check_branch
      %37 = sbr.rel (0) target = $region29
    $region28: #{forward.1} parent=1 // pred_region
      _
    $region29: #{forward.1} parent=1 // pred_fallthru
      _
    // Predicated region
    $region30: #{forward.1} parent=1 // pred_check
      _
    $region31: #{forward.1} parent=1 // pred_check_branch
      %39 = sbr.rel (0) target = $region33
    $region32: #{forward.1} parent=1 // pred_region
      %41 = dma.done [#allocation3], 512
    $region33: #{forward.1} parent=1 // pred_fallthru
      _
    %v43 = vld [vmem:[%s0] sm:$0xf]
    %v44 = vld [vmem:[%s0 + $0x4] sm:$0xf]
    %v45 = vld [vmem:[#allocation2] sm:$0xf]
    %v46 = vld [vmem:[#allocation2 + $0x4] sm:$0xf]
    %v47 = vld [vmem:[#allocation2 + $0x8] sm:$0xf]
    %v48 = vld [vmem:[#allocation2 + $0xc] sm:$0xf]
    %v49 = vld [vmem:[#allocation2 + $0x10] sm:$0xf]
    %v50 = vld [vmem:[#allocation2 + $0x14] sm:$0xf]
    %v51 = vld [vmem:[#allocation2 + $0x18] sm:$0xf]
    %v52 = vld [vmem:[#allocation2 + $0x1c] sm:$0xf]
    %v53 = vld [vmem:[%s2] sm:$0x1]
    %v55 = vperm.slane %v53, 0
    %v59 = vunpack.c.l.b16 %v43
    %v60 = vunpack.c.l.b16 %v44
    %v61 = vpack.c.b16 %v60, %v59
    %v70 = vunpack.c.l.b16 %v45
    %v71 = vunpack.c.l.b16 %v46
    %v72 = vunpack.c.l.b16 %v47
    %v73 = vunpack.c.l.b16 %v48
    %v74 = vunpack.c.l.b16 %v49
    %v75 = vunpack.c.l.b16 %v50
    %v76 = vunpack.c.l.b16 %v51
    %v77 = vunpack.c.l.b16 %v52
    %v78 = vpack.c.b16 %v71, %v70
    %v79 = vpack.c.b16 %v73, %v72
    %v80 = vpack.c.b16 %v75, %v74
    %v81 = vpack.c.b16 %v77, %v76
    %vm86 = vcmask 523264
    %v88 = vsel %vm86, %v61, 0
    %90 = vmatpush.bf16.msra.mxu0 0
    %91 = vmatpush.bf16.msra.mxu0 0
    %92 = vmatpush.bf16.msra.mxu0 0
    %93 = vmatpush.bf16.msra.mxu0 0
    %94 = vmatpush.bf16.msra.mxu0 %v81
    %95 = vmatpush.bf16.msra.mxu0 %v80
    %96 = vmatpush.bf16.msra.mxu0 %v79
    %97 = vmatpush.bf16.msra.mxu0 %v78
    %98 = vmatmul.bf16.gmra.mxu0 %v88
    %v99 = vpop.f32.mrf.mxu0
    %v100 = vadd.f32 %v55, %v99
    %v101 = vpop.f32.mrf.mxu0
    %v102 = vadd.f32 %v55, %v101
    %103 = vdwg.mxu0
    %v104 = vmax.f32 %v100, 0.0
    %v105 = vmax.f32 %v102, 0.0
    %v106 = vpack.c.bf16 %v105, %v104
    %v107 = vld [vmem:[%s3] sm:$0xf]
    %v108 = vld [vmem:[%s3 + $0x4] sm:$0xf]
    %v109 = vld [vmem:[%s3 + $0x8] sm:$0xf]
    %v110 = vld [vmem:[%s3 + $0xc] sm:$0xf]
    %v111 = vld [vmem:[%s3 + $0x10] sm:$0xf]
    %v112 = vld [vmem:[%s3 + $0x14] sm:$0xf]
    %v113 = vld [vmem:[%s3 + $0x18] sm:$0xf]
    %v114 = vld [vmem:[%s3 + $0x1c] sm:$0xf]
    %v115 = vld [vmem:[%s3 + $0x20] sm:$0xf]
    %v116 = vld [vmem:[%s3 + $0x24] sm:$0xf]
    %v117 = vld [vmem:[%s3 + $0x28] sm:$0xf]
    %v118 = vld [vmem:[%s3 + $0x2c] sm:$0xf]
    %v119 = vld [vmem:[%s3 + $0x30] sm:$0xf]
    %v120 = vld [vmem:[%s3 + $0x34] sm:$0xf]
    %v121 = vld [vmem:[%s3 + $0x38] sm:$0xf]
    %v122 = vld [vmem:[%s3 + $0x3c] sm:$0xf]
    %v123 = vld [vmem:[%s4] sm:$0x1]
    %v125 = vperm.slane %v123, 0
    %v143 = vunpack.c.l.b16 %v107
    %v144 = vunpack.c.l.b16 %v108
    %v145 = vunpack.c.l.b16 %v109
    %v146 = vunpack.c.l.b16 %v110
    %v147 = vunpack.c.l.b16 %v111
    %v148 = vunpack.c.l.b16 %v112
    %v149 = vunpack.c.l.b16 %v113
    %v150 = vunpack.c.l.b16 %v114
    %v151 = vunpack.c.l.b16 %v115
    %v152 = vunpack.c.l.b16 %v116
    %v153 = vunpack.c.l.b16 %v117
    %v154 = vunpack.c.l.b16 %v118
    %v155 = vunpack.c.l.b16 %v119
    %v156 = vunpack.c.l.b16 %v120
    %v157 = vunpack.c.l.b16 %v121
    %v158 = vunpack.c.l.b16 %v122
    %v159 = vpack.c.b16 %v144, %v143
    %v160 = vpack.c.b16 %v146, %v145
    %v161 = vpack.c.b16 %v148, %v147
    %v162 = vpack.c.b16 %v150, %v149
    %v163 = vpack.c.b16 %v152, %v151
    %v164 = vpack.c.b16 %v154, %v153
    %v165 = vpack.c.b16 %v156, %v155
    %v166 = vpack.c.b16 %v158, %v157
    %175 = vmatpush.bf16.msra.mxu0 %v166
    %176 = vmatpush.bf16.msra.mxu0 %v165
    %177 = vmatpush.bf16.msra.mxu0 %v164
    %178 = vmatpush.bf16.msra.mxu0 %v163
    %179 = vmatpush.bf16.msra.mxu0 %v162
    %180 = vmatpush.bf16.msra.mxu0 %v161
    %181 = vmatpush.bf16.msra.mxu0 %v160
    %182 = vmatpush.bf16.msra.mxu0 %v159
    %183 = vmatmul.bf16.gmra.mxu0 %v106
    %v184 = vpop.f32.mrf.mxu0
    %v185 = vadd.f32 %v125, %v184
    %v186 = vpop.f32.mrf.mxu0
    %v187 = vadd.f32 %v125, %v186
    %188 = vdwg.mxu0
    %v189 = vmax.f32 %v185, 0.0
    %v190 = vmax.f32 %v187, 0.0
    %v191 = vpack.c.bf16 %v190, %v189
    %v192 = vld [vmem:[%s5] sm:$0xf]
    %v193 = vld [vmem:[%s5 + $0x4] sm:$0xf]
    %v194 = vld [vmem:[%s5 + $0x8] sm:$0xf]
    %v195 = vld [vmem:[%s5 + $0xc] sm:$0xf]
    %v196 = vld [vmem:[%s5 + $0x10] sm:$0xf]
    %v197 = vld [vmem:[%s5 + $0x14] sm:$0xf]
    %v198 = vld [vmem:[%s5 + $0x18] sm:$0xf]
    %v199 = vld [vmem:[%s5 + $0x1c] sm:$0xf]
    %v200 = vld [vmem:[%s5 + $0x20] sm:$0xf]
    %v201 = vld [vmem:[%s5 + $0x24] sm:$0xf]
    %v202 = vld [vmem:[%s5 + $0x28] sm:$0xf]
    %v203 = vld [vmem:[%s5 + $0x2c] sm:$0xf]
    %v204 = vld [vmem:[%s5 + $0x30] sm:$0xf]
    %v205 = vld [vmem:[%s5 + $0x34] sm:$0xf]
    %v206 = vld [vmem:[%s5 + $0x38] sm:$0xf]
    %v207 = vld [vmem:[%s5 + $0x3c] sm:$0xf]
    %v208 = vld [vmem:[%s6] sm:$0x1]
    %v210 = vperm.slane %v208, 0
    %v228 = vunpack.c.l.b16 %v192
    %v229 = vunpack.c.l.b16 %v193
    %v230 = vunpack.c.l.b16 %v194
    %v231 = vunpack.c.l.b16 %v195
    %v232 = vunpack.c.l.b16 %v196
    %v233 = vunpack.c.l.b16 %v197
    %v234 = vunpack.c.l.b16 %v198
    %v235 = vunpack.c.l.b16 %v199
    %v236 = vunpack.c.l.b16 %v200
    %v237 = vunpack.c.l.b16 %v201
    %v238 = vunpack.c.l.b16 %v202
    %v239 = vunpack.c.l.b16 %v203
    %v240 = vunpack.c.l.b16 %v204
    %v241 = vunpack.c.l.b16 %v205
    %v242 = vunpack.c.l.b16 %v206
    %v243 = vunpack.c.l.b16 %v207
    %v244 = vpack.c.b16 %v229, %v228
    %v245 = vpack.c.b16 %v231, %v230
    %v246 = vpack.c.b16 %v233, %v232
    %v247 = vpack.c.b16 %v235, %v234
    %v248 = vpack.c.b16 %v237, %v236
    %v249 = vpack.c.b16 %v239, %v238
    %v250 = vpack.c.b16 %v241, %v240
    %v251 = vpack.c.b16 %v243, %v242
    %260 = vmatpush.bf16.msra.mxu0 %v251
    %261 = vmatpush.bf16.msra.mxu0 %v250
    %262 = vmatpush.bf16.msra.mxu0 %v249
    %263 = vmatpush.bf16.msra.mxu0 %v248
    %264 = vmatpush.bf16.msra.mxu0 %v247
    %265 = vmatpush.bf16.msra.mxu0 %v246
    %266 = vmatpush.bf16.msra.mxu0 %v245
    %267 = vmatpush.bf16.msra.mxu0 %v244
    %268 = vmatmul.bf16.gmra.mxu0 %v191
    %v269 = vpop.f32.mrf.mxu0
    %v270 = vadd.f32 %v210, %v269
    %v271 = vpop.f32.mrf.mxu0
    %v272 = vadd.f32 %v210, %v271
    %273 = vdwg.mxu0
    %274 = vst [vmem:[%s7] sm:$0xff] %v270
    %275 = vst [vmem:[%s7 + $0x8] sm:$0xff] %v272
    // Predicated region
    $region34: #{forward.1} parent=1 // pred_check
      _
    $region35: #{forward.1} parent=1 // pred_check_branch
      %277 = sbr.rel (0) target = $region37
    $region36: #{forward.1} parent=1 // pred_region
      _
    $region37: #{forward.1} parent=1 // pred_fallthru
      _
    // Predicated region
    $region38: #{forward.1} parent=1 // pred_check
      _
    $region39: #{forward.1} parent=1 // pred_check_branch
      %279 = sbr.rel (0) target = $region41
    $region40: #{forward.1} parent=1 // pred_region
      _
    $region41: #{forward.1} parent=1 // pred_fallthru
      _
    %280 = vsyncpa [#allocation3], 1

</llo_original>
